<compile_context>
chip_gen: v6e
topology: v6e:2x2x1
jax: 0.10.0
libtpu: 0.0.40
codegen_flags: <defaults>
</compile_context>

<pallas_src>
import functools

import jax
import jax.numpy as jnp
from jax.experimental import pallas as pl
from jax.experimental.pallas import tpu as pltpu

_EPS = 1e-6                  # torch F.pairwise_distance default eps (added to the difference)
_DEFAULT_MARGIN = 2.0


def _round_up(x, m):
    return ((x + m - 1) // m) * m


def _contrastive_kernel(x1_ref, x2_ref, lbl_ref, out_ref, *,
                        total_b, tile_rows, k, feat, margin, need_mask):
    """One batch tile.

    x1_ref/x2_ref: (TB, k*feat) — k original rows packed lane-dense per block row.
    lbl_ref:       (TB, k)      — matching labels.
    out_ref:       (1, 1) SMEM  — per-tile partial sum of (pos + neg).
    """
    i = pl.program_id(0)

    x1 = x1_ref[...].astype(jnp.float32)                 # upcast in-kernel (free VPU filler)
    x2 = x2_ref[...].astype(jnp.float32)
    diff = x1 - x2 + _EPS                                 # torch pairwise_distance eps
    sq = diff * diff                                      # (TB, k*feat)
    lab = lbl_ref[...].astype(jnp.float32)                # (TB, k) of {0., 1.}

    def tile_sum(apply_mask):
        tot = None
        for g in range(k):                                # static unroll over packed groups
            d2 = jnp.sum(sq[:, g * feat:(g + 1) * feat], axis=-1, keepdims=True)  # (TB, 1)
            lab_g = lab[:, g:g + 1]                                               # (TB, 1)
            dist = jnp.sqrt(d2)                           # only the margin branch needs sqrt
            per_row = (1.0 - lab_g) * d2 + lab_g * jnp.square(
                jnp.maximum(margin - dist, 0.0))
            if apply_mask:
                # Mask padded original rows; `where` (a select) keeps garbage/NaN out.
                sr = jax.lax.broadcasted_iota(jnp.int32, (tile_rows, 1), 0)
                orig = (i * tile_rows + sr) * k + g
                per_row = jnp.where(orig < total_b, per_row, 0.0)
            tot = per_row if tot is None else tot + per_row
        return jnp.sum(tot)

    if need_mask:
        last = pl.num_programs(0) - 1

        @pl.when(i == last)
        def _():
            out_ref[0, 0] = tile_sum(True)

        @pl.when(i != last)
        def _():
            out_ref[0, 0] = tile_sum(False)
    else:
        out_ref[0, 0] = tile_sum(False)


def contrastive_loss(x1, x2, label, *, margin=_DEFAULT_MARGIN, block_rows=None):
    """x1, x2: (B, D) float32 or bfloat16; label: (B,) of {0,1}. Returns scalar f32."""
    assert x1.ndim == 2 and x1.shape == x2.shape
    B, D = x1.shape
    if x2.dtype != x1.dtype:
        x2 = x2.astype(x1.dtype)
    in_dtype = x1.dtype
    itemsize = jnp.dtype(in_dtype).itemsize
    sub = max(8, 32 // itemsize)            # dtype-native sublane multiple (8 f32 / 16 bf16)

    # ---- lane-dense packing for small feature dims --------------------------------
    if D < 128 and 128 % D == 0 and 128 // D <= 16:
        k = 128 // D
    else:
        k = 1
    Bp = _round_up(B, k)
    if Bp != B:
        pad = Bp - B
        x1 = jnp.pad(x1, ((0, pad), (0, 0)))
        x2 = jnp.pad(x2, ((0, pad), (0, 0)))
        label = jnp.pad(jnp.reshape(label, (B,)), ((0, pad),))
    rows, width = Bp // k, k * D
    x1p = jnp.reshape(x1, (rows, width))
    x2p = jnp.reshape(x2, (rows, width))
    lblp = jnp.reshape(label, (rows, k)).astype(in_dtype)   # 0/1 exact in bf16 too

    # ---- tile sizing (uses the lane-padded VMEM footprint) -------------------------
    width_padded = _round_up(width, 128)
    # per packed row: two input blocks + one label block, all lane-padded to 128
    row_bytes = (2 * width_padded + _round_up(k, 128)) * itemsize
    if block_rows is None:
        budget = 8 * 1024 * 1024                    # double-buffered working-set target
        tb_cap = max(sub, (budget // (2 * row_bytes)) // sub * sub)
        tb_split = _round_up(-(-rows // 4), sub)    # keep ~4+ grid steps (v7x megacore)
        block_rows = min(tb_cap, max(tb_split, sub))
    TB = int(max(sub, _round_up(int(block_rows), sub)))
    TB = min(TB, _round_up(rows, sub))
    G = -(-rows // TB)
    need_mask = (Bp != B) or (rows % TB != 0)

    buffered = 2 * TB * row_bytes                   # 2 pipeline buffers per operand
    try:
        vmem_cap = int(pltpu.get_tpu_info().vmem_capacity_bytes)
    except Exception:
        vmem_cap = 64 * 1024 * 1024                 # conservative fallback (v7x per-TC)
    vmem_limit = int(min(vmem_cap // 2, max(16 * 1024 * 1024, 4 * buffered)))

    kernel = functools.partial(
        _contrastive_kernel, total_b=B, tile_rows=TB, k=k, feat=D,
        margin=float(margin), need_mask=bool(need_mask))

    cost = pl.CostEstimate(
        flops=4 * B * D + 12 * B,                   # diff/square/lane-reduce + row epilogue
        transcendentals=B,                          # one sqrt per row
        bytes_accessed=2 * B * D * itemsize + B * itemsize + G * 4,
    )

    partials = pl.pallas_call(
        kernel,
        out_shape=jax.ShapeDtypeStruct((G, 1), jnp.float32),
        grid=(G,),
        in_specs=[
            pl.BlockSpec((TB, width), lambda i: (i, 0)),
            pl.BlockSpec((TB, width), lambda i: (i, 0)),
            pl.BlockSpec((TB, k), lambda i: (i, 0)),
        ],
        out_specs=pl.BlockSpec((1, 1), lambda i: (i, 0),
                               memory_space=pltpu.MemorySpace.SMEM),
        compiler_params=pltpu.CompilerParams(
            dimension_semantics=("parallel",),      # independent tiles -> both TCs on v7x
            vmem_limit_bytes=vmem_limit,
        ),
        cost_estimate=cost,
    )(x1p, x2p, lblp)

    # Tiny final combine in the wrapper; divide by the true batch size.
    return jnp.sum(partials) / B


def _reference(x1, x2, label, margin=_DEFAULT_MARGIN):
    diff = x1.astype(jnp.float32) - x2.astype(jnp.float32) + _EPS
    dist = jnp.sqrt(jnp.sum(diff * diff, axis=-1))
    lab = label.astype(jnp.float32)
    pos = (1.0 - lab) * dist ** 2
    neg = lab * jnp.square(jnp.maximum(margin - dist, 0.0))
    return jnp.mean(pos + neg)


if __name__ == "__main__":
    key = jax.random.PRNGKey(0)
    ks = jax.random.split(key, 15)

    # Case 1: module-typical shapes (packed lane-dense path, D=32 -> k=4).
    B, D = 8, 32
    x1 = jax.random.normal(ks[0], (B, D), dtype=jnp.float32)
    x2 = jax.random.normal(ks[1], (B, D), dtype=jnp.float32)
    lab = jax.random.bernoulli(ks[2], p=0.5, shape=(B,)).astype(jnp.float32)
    out = contrastive_loss(x1, x2, lab)
    jax.block_until_ready(out)
    assert jnp.allclose(out, _reference(x1, x2, lab), rtol=1e-5, atol=1e-5)

    # Case 2: ragged batch exercising tail masking inside a packed tile.
    B2, D2 = 20, 32
    y1 = jax.random.normal(ks[3], (B2, D2), dtype=jnp.float32)
    y2 = jax.random.normal(ks[4], (B2, D2), dtype=jnp.float32)
    lab2 = jax.random.bernoulli(ks[5], p=0.5, shape=(B2,)).astype(jnp.float32)
    out2 = contrastive_loss(y1, y2, lab2)
    jax.block_until_ready(out2)
    assert jnp.allclose(out2, _reference(y1, y2, lab2), rtol=1e-5, atol=1e-5)

    # Case 3: multi-step grid (several per-tile partial sums + wrapper combine).
    B3, D3 = 160, 32
    z1 = jax.random.normal(ks[6], (B3, D3), dtype=jnp.float32)
    z2 = jax.random.normal(ks[7], (B3, D3), dtype=jnp.float32)
    lab3 = jax.random.bernoulli(ks[8], p=0.5, shape=(B3,)).astype(jnp.float32)
    out3 = contrastive_loss(z1, z2, lab3, block_rows=8)
    jax.block_until_ready(out3)
    assert jnp.allclose(out3, _reference(z1, z2, lab3), rtol=1e-5, atol=1e-5)

    # Case 4: plain (un-packed) path — feature dim that does not divide 128.
    B4, D4 = 10, 48
    w1 = jax.random.normal(ks[9], (B4, D4), dtype=jnp.float32)
    w2 = jax.random.normal(ks[10], (B4, D4), dtype=jnp.float32)
    lab4 = jax.random.bernoulli(ks[11], p=0.5, shape=(B4,)).astype(jnp.float32)
    out4 = contrastive_loss(w1, w2, lab4)
    jax.block_until_ready(out4)
    assert jnp.allclose(out4, _reference(w1, w2, lab4), rtol=1e-5, atol=1e-5)

    # Case 5: bf16 ingestion (halved HBM traffic), 16-sublane tile rounding.
    B5, D5 = 16, 32
    v1 = jax.random.normal(ks[12], (B5, D5), dtype=jnp.float32).astype(jnp.bfloat16)
    v2 = jax.random.normal(ks[13], (B5, D5), dtype=jnp.float32).astype(jnp.bfloat16)
    lab5 = jax.random.bernoulli(ks[14], p=0.5, shape=(B5,)).astype(jnp.float32)
    out5 = contrastive_loss(v1, v2, lab5)
    jax.block_until_ready(out5)
    assert jnp.allclose(out5, _reference(v1, v2, lab5), rtol=1e-5, atol=1e-5)

    print("KERNEL_OK")
</pallas_src>

<mosaic_0001>
module attributes {stable_mosaic.version = 11 : i64} {
  func.func @_contrastive_kernel(%arg0: i32, %arg1: memref<8x128xf32, #tpu.memory_space<vmem>>, %arg2: memref<8x128xf32, #tpu.memory_space<vmem>>, %arg3: memref<8x4xf32, #tpu.memory_space<vmem>>, %arg4: memref<1x1xf32, #tpu.memory_space<smem>>) attributes {dimension_semantics = [#tpu.dimension_semantics<parallel>], iteration_bounds = array<i64: 1>, scalar_prefetch = 0 : i64, scratch_operands = 0 : i64, tpu.core_type = #tpu.core_type<tc>, window_params = [{transform_indices = @transform_0, window_bounds = array<i64: 8, 128>}, {transform_indices = @transform_1, window_bounds = array<i64: 8, 128>}, {transform_indices = @transform_2, window_bounds = array<i64: 8, 4>}, {transform_indices = @transform_3, window_bounds = array<i64: 1, 1>}]} {
    %c0 = arith.constant 0 : index
    %c0_0 = arith.constant 0 : index
    %0 = vector.load %arg1[%c0, %c0_0] : memref<8x128xf32, #tpu.memory_space<vmem>>, vector<8x128xf32>
    %c0_1 = arith.constant 0 : index
    %c0_2 = arith.constant 0 : index
    %1 = vector.load %arg2[%c0_1, %c0_2] : memref<8x128xf32, #tpu.memory_space<vmem>>, vector<8x128xf32>
    %2 = arith.subf %0, %1 : vector<8x128xf32>
    %cst = arith.constant 9.99999997E-7 : f32
    %3 = vector.broadcast %cst : f32 to vector<8x128xf32>
    %4 = arith.addf %2, %3 : vector<8x128xf32>
    %5 = arith.mulf %4, %4 : vector<8x128xf32>
    %c0_3 = arith.constant 0 : index
    %c0_4 = arith.constant 0 : index
    %6 = vector.load %arg3[%c0_3, %c0_4] : memref<8x4xf32, #tpu.memory_space<vmem>>, vector<8x4xf32>
    %c0_i32 = arith.constant 0 : i32
    %7 = arith.cmpi eq, %arg0, %c0_i32 : i32
    %8 = arith.extui %7 : i1 to i32
    %c0_i32_5 = arith.constant 0 : i32
    %9 = arith.cmpi ne, %8, %c0_i32_5 : i32
    scf.if %9 {
      %13 = vector.extract_strided_slice %5 {offsets = [0, 0], sizes = [8, 32], strides = [1, 1]} : vector<8x128xf32> to vector<8x32xf32>
      %cst_8 = arith.constant dense<0.000000e+00> : vector<8xf32>
      %14 = vector.multi_reduction <add>, %13, %cst_8 [1] : vector<8x32xf32> to vector<8xf32>
      %15 = vector.shape_cast %14 : vector<8xf32> to vector<8x1xf32>
      %16 = vector.extract_strided_slice %6 {offsets = [0, 0], sizes = [8, 1], strides = [1, 1]} : vector<8x4xf32> to vector<8x1xf32>
      %17 = math.sqrt %15 : vector<8x1xf32>
      %cst_9 = arith.constant 1.000000e+00 : f32
      %18 = vector.broadcast %cst_9 : f32 to vector<8x1xf32>
      %19 = arith.subf %18, %16 : vector<8x1xf32>
      %20 = arith.mulf %19, %15 : vector<8x1xf32>
      %cst_10 = arith.constant 2.000000e+00 : f32
      %21 = vector.broadcast %cst_10 : f32 to vector<8x1xf32>
      %22 = arith.subf %21, %17 : vector<8x1xf32>
      %cst_11 = arith.constant 0.000000e+00 : f32
      %23 = vector.broadcast %cst_11 : f32 to vector<8x1xf32>
      %24 = arith.maximumf %22, %23 : vector<8x1xf32>
      %25 = arith.mulf %24, %24 : vector<8x1xf32>
      %26 = arith.mulf %16, %25 : vector<8x1xf32>
      %27 = arith.addf %20, %26 : vector<8x1xf32>
      %28 = tpu.iota {dimensions = array<i32: 0>} : vector<8x1xi32>
      %c8_i32 = arith.constant 8 : i32
      %29 = arith.muli %arg0, %c8_i32 : i32
      %30 = vector.broadcast %29 : i32 to vector<8x1xi32>
      %31 = arith.addi %30, %28 : vector<8x1xi32>
      %c4_i32 = arith.constant 4 : i32
      %32 = vector.broadcast %c4_i32 : i32 to vector<8x1xi32>
      %33 = arith.muli %31, %32 : vector<8x1xi32>
      %c0_i32_12 = arith.constant 0 : i32
      %34 = vector.broadcast %c0_i32_12 : i32 to vector<8x1xi32>
      %35 = arith.addi %33, %34 : vector<8x1xi32>
      %c8_i32_13 = arith.constant 8 : i32
      %36 = vector.broadcast %c8_i32_13 : i32 to vector<8x1xi32>
      %37 = arith.cmpi slt, %35, %36 : vector<8x1xi32>
      %cst_14 = arith.constant 0.000000e+00 : f32
      %38 = vector.broadcast %cst_14 : f32 to vector<8x1xf32>
      %39 = arith.select %37, %27, %38 : vector<8x1xi1>, vector<8x1xf32>
      %40 = vector.extract_strided_slice %5 {offsets = [0, 32], sizes = [8, 32], strides = [1, 1]} : vector<8x128xf32> to vector<8x32xf32>
      %cst_15 = arith.constant dense<0.000000e+00> : vector<8xf32>
      %41 = vector.multi_reduction <add>, %40, %cst_15 [1] : vector<8x32xf32> to vector<8xf32>
      %42 = vector.shape_cast %41 : vector<8xf32> to vector<8x1xf32>
      %43 = vector.extract_strided_slice %6 {offsets = [0, 1], sizes = [8, 1], strides = [1, 1]} : vector<8x4xf32> to vector<8x1xf32>
      %44 = math.sqrt %42 : vector<8x1xf32>
      %cst_16 = arith.constant 1.000000e+00 : f32
      %45 = vector.broadcast %cst_16 : f32 to vector<8x1xf32>
      %46 = arith.subf %45, %43 : vector<8x1xf32>
      %47 = arith.mulf %46, %42 : vector<8x1xf32>
      %cst_17 = arith.constant 2.000000e+00 : f32
      %48 = vector.broadcast %cst_17 : f32 to vector<8x1xf32>
      %49 = arith.subf %48, %44 : vector<8x1xf32>
      %cst_18 = arith.constant 0.000000e+00 : f32
      %50 = vector.broadcast %cst_18 : f32 to vector<8x1xf32>
      %51 = arith.maximumf %49, %50 : vector<8x1xf32>
      %52 = arith.mulf %51, %51 : vector<8x1xf32>
      %53 = arith.mulf %43, %52 : vector<8x1xf32>
      %54 = arith.addf %47, %53 : vector<8x1xf32>
      %55 = tpu.iota {dimensions = array<i32: 0>} : vector<8x1xi32>
      %c8_i32_19 = arith.constant 8 : i32
      %56 = arith.muli %arg0, %c8_i32_19 : i32
      %57 = vector.broadcast %56 : i32 to vector<8x1xi32>
      %58 = arith.addi %57, %55 : vector<8x1xi32>
      %c4_i32_20 = arith.constant 4 : i32
      %59 = vector.broadcast %c4_i32_20 : i32 to vector<8x1xi32>
      %60 = arith.muli %58, %59 : vector<8x1xi32>
      %c1_i32 = arith.constant 1 : i32
      %61 = vector.broadcast %c1_i32 : i32 to vector<8x1xi32>
      %62 = arith.addi %60, %61 : vector<8x1xi32>
      %c8_i32_21 = arith.constant 8 : i32
      %63 = vector.broadcast %c8_i32_21 : i32 to vector<8x1xi32>
      %64 = arith.cmpi slt, %62, %63 : vector<8x1xi32>
      %cst_22 = arith.constant 0.000000e+00 : f32
      %65 = vector.broadcast %cst_22 : f32 to vector<8x1xf32>
      %66 = arith.select %64, %54, %65 : vector<8x1xi1>, vector<8x1xf32>
      %67 = arith.addf %39, %66 : vector<8x1xf32>
      %68 = vector.extract_strided_slice %5 {offsets = [0, 64], sizes = [8, 32], strides = [1, 1]} : vector<8x128xf32> to vector<8x32xf32>
      %cst_23 = arith.constant dense<0.000000e+00> : vector<8xf32>
      %69 = vector.multi_reduction <add>, %68, %cst_23 [1] : vector<8x32xf32> to vector<8xf32>
      %70 = vector.shape_cast %69 : vector<8xf32> to vector<8x1xf32>
      %71 = vector.extract_strided_slice %6 {offsets = [0, 2], sizes = [8, 1], strides = [1, 1]} : vector<8x4xf32> to vector<8x1xf32>
      %72 = math.sqrt %70 : vector<8x1xf32>
      %cst_24 = arith.constant 1.000000e+00 : f32
      %73 = vector.broadcast %cst_24 : f32 to vector<8x1xf32>
      %74 = arith.subf %73, %71 : vector<8x1xf32>
      %75 = arith.mulf %74, %70 : vector<8x1xf32>
      %cst_25 = arith.constant 2.000000e+00 : f32
      %76 = vector.broadcast %cst_25 : f32 to vector<8x1xf32>
      %77 = arith.subf %76, %72 : vector<8x1xf32>
      %cst_26 = arith.constant 0.000000e+00 : f32
      %78 = vector.broadcast %cst_26 : f32 to vector<8x1xf32>
      %79 = arith.maximumf %77, %78 : vector<8x1xf32>
      %80 = arith.mulf %79, %79 : vector<8x1xf32>
      %81 = arith.mulf %71, %80 : vector<8x1xf32>
      %82 = arith.addf %75, %81 : vector<8x1xf32>
      %83 = tpu.iota {dimensions = array<i32: 0>} : vector<8x1xi32>
      %c8_i32_27 = arith.constant 8 : i32
      %84 = arith.muli %arg0, %c8_i32_27 : i32
      %85 = vector.broadcast %84 : i32 to vector<8x1xi32>
      %86 = arith.addi %85, %83 : vector<8x1xi32>
      %c4_i32_28 = arith.constant 4 : i32
      %87 = vector.broadcast %c4_i32_28 : i32 to vector<8x1xi32>
      %88 = arith.muli %86, %87 : vector<8x1xi32>
      %c2_i32 = arith.constant 2 : i32
      %89 = vector.broadcast %c2_i32 : i32 to vector<8x1xi32>
      %90 = arith.addi %88, %89 : vector<8x1xi32>
      %c8_i32_29 = arith.constant 8 : i32
      %91 = vector.broadcast %c8_i32_29 : i32 to vector<8x1xi32>
      %92 = arith.cmpi slt, %90, %91 : vector<8x1xi32>
      %cst_30 = arith.constant 0.000000e+00 : f32
      %93 = vector.broadcast %cst_30 : f32 to vector<8x1xf32>
      %94 = arith.select %92, %82, %93 : vector<8x1xi1>, vector<8x1xf32>
      %95 = arith.addf %67, %94 : vector<8x1xf32>
      %96 = vector.extract_strided_slice %5 {offsets = [0, 96], sizes = [8, 32], strides = [1, 1]} : vector<8x128xf32> to vector<8x32xf32>
      %cst_31 = arith.constant dense<0.000000e+00> : vector<8xf32>
      %97 = vector.multi_reduction <add>, %96, %cst_31 [1] : vector<8x32xf32> to vector<8xf32>
      %98 = vector.shape_cast %97 : vector<8xf32> to vector<8x1xf32>
      %99 = vector.extract_strided_slice %6 {offsets = [0, 3], sizes = [8, 1], strides = [1, 1]} : vector<8x4xf32> to vector<8x1xf32>
      %100 = math.sqrt %98 : vector<8x1xf32>
      %cst_32 = arith.constant 1.000000e+00 : f32
      %101 = vector.broadcast %cst_32 : f32 to vector<8x1xf32>
      %102 = arith.subf %101, %99 : vector<8x1xf32>
      %103 = arith.mulf %102, %98 : vector<8x1xf32>
      %cst_33 = arith.constant 2.000000e+00 : f32
      %104 = vector.broadcast %cst_33 : f32 to vector<8x1xf32>
      %105 = arith.subf %104, %100 : vector<8x1xf32>
      %cst_34 = arith.constant 0.000000e+00 : f32
      %106 = vector.broadcast %cst_34 : f32 to vector<8x1xf32>
      %107 = arith.maximumf %105, %106 : vector<8x1xf32>
      %108 = arith.mulf %107, %107 : vector<8x1xf32>
      %109 = arith.mulf %99, %108 : vector<8x1xf32>
      %110 = arith.addf %103, %109 : vector<8x1xf32>
      %111 = tpu.iota {dimensions = array<i32: 0>} : vector<8x1xi32>
      %c8_i32_35 = arith.constant 8 : i32
      %112 = arith.muli %arg0, %c8_i32_35 : i32
      %113 = vector.broadcast %112 : i32 to vector<8x1xi32>
      %114 = arith.addi %113, %111 : vector<8x1xi32>
      %c4_i32_36 = arith.constant 4 : i32
      %115 = vector.broadcast %c4_i32_36 : i32 to vector<8x1xi32>
      %116 = arith.muli %114, %115 : vector<8x1xi32>
      %c3_i32 = arith.constant 3 : i32
      %117 = vector.broadcast %c3_i32 : i32 to vector<8x1xi32>
      %118 = arith.addi %116, %117 : vector<8x1xi32>
      %c8_i32_37 = arith.constant 8 : i32
      %119 = vector.broadcast %c8_i32_37 : i32 to vector<8x1xi32>
      %120 = arith.cmpi slt, %118, %119 : vector<8x1xi32>
      %cst_38 = arith.constant 0.000000e+00 : f32
      %121 = vector.broadcast %cst_38 : f32 to vector<8x1xf32>
      %122 = arith.select %120, %110, %121 : vector<8x1xi1>, vector<8x1xf32>
      %123 = arith.addf %95, %122 : vector<8x1xf32>
      %124 = vector.shape_cast %123 : vector<8x1xf32> to vector<1x8x1xf32>
      %cst_39 = arith.constant dense<0.000000e+00> : vector<1xf32>
      %125 = vector.multi_reduction <add>, %124, %cst_39 [1, 2] : vector<1x8x1xf32> to vector<1xf32>
      %126 = vector.shape_cast %125 : vector<1xf32> to vector<1x1x1xf32>
      %127 = vector.extract %126[0, 0, 0] : f32 from vector<1x1x1xf32>
      %c0_40 = arith.constant 0 : index
      %c0_41 = arith.constant 0 : index
      %128 = memref.load %arg4[%c0_40, %c0_41] : memref<1x1xf32, #tpu.memory_space<smem>>
      memref.store %127, %arg4[%c0_40, %c0_41] : memref<1x1xf32, #tpu.memory_space<smem>>
    } else {
    }
    %c0_i32_6 = arith.constant 0 : i32
    %10 = arith.cmpi ne, %arg0, %c0_i32_6 : i32
    %11 = arith.extui %10 : i1 to i32
    %c0_i32_7 = arith.constant 0 : i32
    %12 = arith.cmpi ne, %11, %c0_i32_7 : i32
    scf.if %12 {
      %13 = vector.extract_strided_slice %5 {offsets = [0, 0], sizes = [8, 32], strides = [1, 1]} : vector<8x128xf32> to vector<8x32xf32>
      %cst_8 = arith.constant dense<0.000000e+00> : vector<8xf32>
      %14 = vector.multi_reduction <add>, %13, %cst_8 [1] : vector<8x32xf32> to vector<8xf32>
      %15 = vector.shape_cast %14 : vector<8xf32> to vector<8x1xf32>
      %16 = vector.extract_strided_slice %6 {offsets = [0, 0], sizes = [8, 1], strides = [1, 1]} : vector<8x4xf32> to vector<8x1xf32>
      %17 = math.sqrt %15 : vector<8x1xf32>
      %cst_9 = arith.constant 1.000000e+00 : f32
      %18 = vector.broadcast %cst_9 : f32 to vector<8x1xf32>
      %19 = arith.subf %18, %16 : vector<8x1xf32>
      %20 = arith.mulf %19, %15 : vector<8x1xf32>
      %cst_10 = arith.constant 2.000000e+00 : f32
      %21 = vector.broadcast %cst_10 : f32 to vector<8x1xf32>
      %22 = arith.subf %21, %17 : vector<8x1xf32>
      %cst_11 = arith.constant 0.000000e+00 : f32
      %23 = vector.broadcast %cst_11 : f32 to vector<8x1xf32>
      %24 = arith.maximumf %22, %23 : vector<8x1xf32>
      %25 = arith.mulf %24, %24 : vector<8x1xf32>
      %26 = arith.mulf %16, %25 : vector<8x1xf32>
      %27 = arith.addf %20, %26 : vector<8x1xf32>
      %28 = vector.extract_strided_slice %5 {offsets = [0, 32], sizes = [8, 32], strides = [1, 1]} : vector<8x128xf32> to vector<8x32xf32>
      %cst_12 = arith.constant dense<0.000000e+00> : vector<8xf32>
      %29 = vector.multi_reduction <add>, %28, %cst_12 [1] : vector<8x32xf32> to vector<8xf32>
      %30 = vector.shape_cast %29 : vector<8xf32> to vector<8x1xf32>
      %31 = vector.extract_strided_slice %6 {offsets = [0, 1], sizes = [8, 1], strides = [1, 1]} : vector<8x4xf32> to vector<8x1xf32>
      %32 = math.sqrt %30 : vector<8x1xf32>
      %cst_13 = arith.constant 1.000000e+00 : f32
      %33 = vector.broadcast %cst_13 : f32 to vector<8x1xf32>
      %34 = arith.subf %33, %31 : vector<8x1xf32>
      %35 = arith.mulf %34, %30 : vector<8x1xf32>
      %cst_14 = arith.constant 2.000000e+00 : f32
      %36 = vector.broadcast %cst_14 : f32 to vector<8x1xf32>
      %37 = arith.subf %36, %32 : vector<8x1xf32>
      %cst_15 = arith.constant 0.000000e+00 : f32
      %38 = vector.broadcast %cst_15 : f32 to vector<8x1xf32>
      %39 = arith.maximumf %37, %38 : vector<8x1xf32>
      %40 = arith.mulf %39, %39 : vector<8x1xf32>
      %41 = arith.mulf %31, %40 : vector<8x1xf32>
      %42 = arith.addf %35, %41 : vector<8x1xf32>
      %43 = arith.addf %27, %42 : vector<8x1xf32>
      %44 = vector.extract_strided_slice %5 {offsets = [0, 64], sizes = [8, 32], strides = [1, 1]} : vector<8x128xf32> to vector<8x32xf32>
      %cst_16 = arith.constant dense<0.000000e+00> : vector<8xf32>
      %45 = vector.multi_reduction <add>, %44, %cst_16 [1] : vector<8x32xf32> to vector<8xf32>
      %46 = vector.shape_cast %45 : vector<8xf32> to vector<8x1xf32>
      %47 = vector.extract_strided_slice %6 {offsets = [0, 2], sizes = [8, 1], strides = [1, 1]} : vector<8x4xf32> to vector<8x1xf32>
      %48 = math.sqrt %46 : vector<8x1xf32>
      %cst_17 = arith.constant 1.000000e+00 : f32
      %49 = vector.broadcast %cst_17 : f32 to vector<8x1xf32>
      %50 = arith.subf %49, %47 : vector<8x1xf32>
      %51 = arith.mulf %50, %46 : vector<8x1xf32>
      %cst_18 = arith.constant 2.000000e+00 : f32
      %52 = vector.broadcast %cst_18 : f32 to vector<8x1xf32>
      %53 = arith.subf %52, %48 : vector<8x1xf32>
      %cst_19 = arith.constant 0.000000e+00 : f32
      %54 = vector.broadcast %cst_19 : f32 to vector<8x1xf32>
      %55 = arith.maximumf %53, %54 : vector<8x1xf32>
      %56 = arith.mulf %55, %55 : vector<8x1xf32>
      %57 = arith.mulf %47, %56 : vector<8x1xf32>
      %58 = arith.addf %51, %57 : vector<8x1xf32>
      %59 = arith.addf %43, %58 : vector<8x1xf32>
      %60 = vector.extract_strided_slice %5 {offsets = [0, 96], sizes = [8, 32], strides = [1, 1]} : vector<8x128xf32> to vector<8x32xf32>
      %cst_20 = arith.constant dense<0.000000e+00> : vector<8xf32>
      %61 = vector.multi_reduction <add>, %60, %cst_20 [1] : vector<8x32xf32> to vector<8xf32>
      %62 = vector.shape_cast %61 : vector<8xf32> to vector<8x1xf32>
      %63 = vector.extract_strided_slice %6 {offsets = [0, 3], sizes = [8, 1], strides = [1, 1]} : vector<8x4xf32> to vector<8x1xf32>
      %64 = math.sqrt %62 : vector<8x1xf32>
      %cst_21 = arith.constant 1.000000e+00 : f32
      %65 = vector.broadcast %cst_21 : f32 to vector<8x1xf32>
      %66 = arith.subf %65, %63 : vector<8x1xf32>
      %67 = arith.mulf %66, %62 : vector<8x1xf32>
      %cst_22 = arith.constant 2.000000e+00 : f32
      %68 = vector.broadcast %cst_22 : f32 to vector<8x1xf32>
      %69 = arith.subf %68, %64 : vector<8x1xf32>
      %cst_23 = arith.constant 0.000000e+00 : f32
      %70 = vector.broadcast %cst_23 : f32 to vector<8x1xf32>
      %71 = arith.maximumf %69, %70 : vector<8x1xf32>
      %72 = arith.mulf %71, %71 : vector<8x1xf32>
      %73 = arith.mulf %63, %72 : vector<8x1xf32>
      %74 = arith.addf %67, %73 : vector<8x1xf32>
      %75 = arith.addf %59, %74 : vector<8x1xf32>
      %76 = vector.shape_cast %75 : vector<8x1xf32> to vector<1x8x1xf32>
      %cst_24 = arith.constant dense<0.000000e+00> : vector<1xf32>
      %77 = vector.multi_reduction <add>, %76, %cst_24 [1, 2] : vector<1x8x1xf32> to vector<1xf32>
      %78 = vector.shape_cast %77 : vector<1xf32> to vector<1x1x1xf32>
      %79 = vector.extract %78[0, 0, 0] : f32 from vector<1x1x1xf32>
      %c0_25 = arith.constant 0 : index
      %c0_26 = arith.constant 0 : index
      %80 = memref.load %arg4[%c0_25, %c0_26] : memref<1x1xf32, #tpu.memory_space<smem>>
      memref.store %79, %arg4[%c0_25, %c0_26] : memref<1x1xf32, #tpu.memory_space<smem>>
    } else {
    }
    return
  }
  func.func @transform_0(%arg0: i32) -> (i32, i32) {
    %c0_i32 = arith.constant 0 : i32
    %c0_i32_0 = arith.constant 0 : i32
    return %arg0, %c0_i32 : i32, i32
  }
  func.func @transform_1(%arg0: i32) -> (i32, i32) {
    %c0_i32 = arith.constant 0 : i32
    %c0_i32_0 = arith.constant 0 : i32
    return %arg0, %c0_i32 : i32, i32
  }
  func.func @transform_2(%arg0: i32) -> (i32, i32) {
    %c0_i32 = arith.constant 0 : i32
    %c0_i32_0 = arith.constant 0 : i32
    return %arg0, %c0_i32 : i32, i32
  }
  func.func @transform_3(%arg0: i32) -> (i32, i32) {
    %c0_i32 = arith.constant 0 : i32
    %c0_i32_0 = arith.constant 0 : i32
    return %arg0, %c0_i32 : i32, i32
  }
}

</mosaic_0001>

<llo_original>
// kernel: tpu_custom_call.1
$region0: #{tpu_custom_call.1}
  #allocation0 [shape = 'u32[]', space=smem, size = 0x4, offset = 0x4, fixed_abs, tag = 'smem constant byte address 0x4 - core index']
  #allocation1 [shape = 'u32[144,128]{1,0:T(1,128)}', space=vmem, size = 0x12000, scoped, tag = 'internal scratch']
  %s0 = inlined_call_operand.hbm [shape: f32[2,128], index: 0, kind: input, shape index: {}]
  %s1 = inlined_call_operand.hbm [shape: f32[2,128], index: 1, kind: input, shape index: {}]
  %s2 = inlined_call_operand.vmem [shape: f32[2,4], index: 2, kind: input, shape index: {}]
  %s3 = inlined_call_operand.hbm [shape: f32[1,1], index: 3, kind: output, shape index: {}]
  %s4 = sld [smem:[#allocation0]]
  $region38: #{tpu_custom_call.1} parent=0
    _
  %s6 = ssub.s32 1, %s4
  %s7 = scalar_select 0, %s6, %s4
  $region1: #{tpu_custom_call.1} parent=0
    #allocation2 [shape = 'u8[4096]{0}', space=vmem, size = 0x1000, scoped, tag = 'input window, operand 0, single buffered']
    #allocation3 [shape = 's32[1]{0}', space=sflag, size = 0x4, scoped, tag = 'scoped memory for tpu_custom_call.1']
    #allocation4 [shape = 's32[1]{0}', space=sflag, size = 0x4, scoped, tag = 'scoped memory for tpu_custom_call.1']
    #allocation5 [shape = 'u8[4096]{0}', space=vmem, size = 0x1000, scoped, tag = 'input window, operand 1, single buffered']
    #allocation6 [shape = 's32[1]{0}', space=sflag, size = 0x4, scoped, tag = 'scoped memory for tpu_custom_call.1']
    #allocation7 [shape = 'u8[512]{0}', space=smem, size = 0x200, scoped, tag = 'output window, operand 0, single buffered']
    %8 = vsyncpa [#allocation3], 0
    %9 = vsyncpa [#allocation6], 0
    %10 = vsyncpa [#allocation4], 0
    // Predicated region
    $region2: #{tpu_custom_call.1} parent=1 // pred_check
      _
    $region3: #{tpu_custom_call.1} parent=1 // pred_check_branch
      %12 = sbr.rel (0) target = $region5
    $region4: #{tpu_custom_call.1} parent=1 // pred_region
      %s14 = ssub.s32 128, 32
      %15 = vsyncadd [#allocation3], %s14
      %s16 = sshll.u32 [#allocation2], 4
      %s17 = int_to_ptr.vmem [resolvable:$true] %s16
      %22 = dma.hbm_to_vmem [thread:$0]  %s0, 32, %s17, [#allocation3], 32, 32, 2
    $region5: #{tpu_custom_call.1} parent=1 // pred_fallthru
      _
    // Predicated region
    $region6: #{tpu_custom_call.1} parent=1 // pred_check
      _
    $region7: #{tpu_custom_call.1} parent=1 // pred_check_branch
      %24 = sbr.rel (0) target = $region9
    $region8: #{tpu_custom_call.1} parent=1 // pred_region
      %s26 = ssub.s32 128, 32
      %27 = vsyncadd [#allocation6], %s26
      %s28 = sshll.u32 [#allocation5], 4
      %s29 = int_to_ptr.vmem [resolvable:$true] %s28
      %34 = dma.hbm_to_vmem [thread:$0]  %s1, 32, %s29, [#allocation6], 32, 32, 2
    $region9: #{tpu_custom_call.1} parent=1 // pred_fallthru
      _
    // Predicated region
    $region10: #{tpu_custom_call.1} parent=1 // pred_check
      _
    $region11: #{tpu_custom_call.1} parent=1 // pred_check_branch
      %36 = sbr.rel (0) target = $region13
    $region12: #{tpu_custom_call.1} parent=1 // pred_region
      _
    $region13: #{tpu_custom_call.1} parent=1 // pred_fallthru
      _
    // Predicated region
    $region14: #{tpu_custom_call.1} parent=1 // pred_check
      _
    $region15: #{tpu_custom_call.1} parent=1 // pred_check_branch
      %38 = sbr.rel (0) target = $region17
    $region16: #{tpu_custom_call.1} parent=1 // pred_region
      %39 = dma.done [#allocation3], 128
    $region17: #{tpu_custom_call.1} parent=1 // pred_fallthru
      _
    // Predicated region
    $region18: #{tpu_custom_call.1} parent=1 // pred_check
      _
    $region19: #{tpu_custom_call.1} parent=1 // pred_check_branch
      %41 = sbr.rel (0) target = $region21
    $region20: #{tpu_custom_call.1} parent=1 // pred_region
      %42 = dma.done [#allocation6], 128
    $region21: #{tpu_custom_call.1} parent=1 // pred_fallthru
      _
    %v43 = vld [vmem:[#allocation2] sm:$0xff]
    %v44 = vld [vmem:[#allocation5] sm:$0xff]
    %v45 = vsub.f32 %v43, %v44
    %v46 = vadd.f32 %v45, 1e-06
    %v47 = vmul.f32 %v46, %v46
    %v48 = vld [vmem:[%s2] sm:$0xff]
    %p49 = scmp.eq.s32.totalorder 0, 0
    // Predicated region
    $region22: #{tpu_custom_call.1} parent=1 // pred_check
      %p50 = pneg %p49
    $region23: #{tpu_custom_call.1} parent=1 // pred_check_branch
      %52 = sbr.rel (%p50) target = $region25
    $region24: #{tpu_custom_call.1} parent=1 // pred_region
      %vm53 = vcmask 261120
      %v54 = vsel %vm53, %v47, 0.0
      %55 = vadd.xlane.f32.xlu0 %v54
      %v56 = vpop.xlane.xlu0 %55
      %v57 = vrsqrt.pop %v56
      %v58 = vmul.f32 %v56, %v57
      %vm59 = vcmp.eq.f32.partialorder %v56, inf
      %v60 = vsel %vm59, %v56, %v58
      %vm61 = vcmp.eq.f32.partialorder %v56, 0.0
      %v62 = vand.u32 %v56, 2147483648
      %v63 = vsel %vm61, %v62, %v60
      %v64 = vsub.f32 1.0, %v48
      %v65 = vmul.f32 %v64, %v56
      %v66 = vsub.f32 2.0, %v63
      %v67 = vmax.f32 %v66, 0.0
      %v68 = vmul.f32 %v67, %v67
      %v69 = vmul.f32 %v48, %v68
      %v70 = vadd.f32 %v65, %v69
      %v71 = vlaneseq
      %v72 = vshrl.u32 %v71, 7
      %s73 = smul.u32 0, 8
      %v74 = vstv %s73
      %v75 = vadd.s32 %v74, %v72
      %v76 = vmul.u32 %v75, 4
      %vm77 = vcmp.lt.s32.totalorder %v76, 8
      %v78 = vsel %vm77, %v70, 0.0
      %80 = vrot.lane.b32.xlu0 %v47, 96
      %v81 = vpop.permute.xlu0 %80
      %v83 = vsel %vm53, %v81, 0.0
      %84 = vadd.xlane.f32.xlu0 %v83
      %v85 = vpop.xlane.xlu0 %84
      %v86 = vrsqrt.pop %v85
      %v87 = vmul.f32 %v85, %v86
      %vm88 = vcmp.eq.f32.partialorder %v85, inf
      %v89 = vsel %vm88, %v85, %v87
      %vm90 = vcmp.eq.f32.partialorder %v85, 0.0
      %v91 = vand.u32 %v85, 2147483648
      %v92 = vsel %vm90, %v91, %v89
      %v93 = vmul.f32 %v64, %v85
      %v94 = vsub.f32 2.0, %v92
      %v95 = vmax.f32 %v94, 0.0
      %v96 = vmul.f32 %v95, %v95
      %v97 = vmul.f32 %v48, %v96
      %v98 = vadd.f32 %v93, %v97
      %v99 = vadd.s32 %v76, 1
      %vm100 = vcmp.lt.s32.totalorder %v99, 8
      %v101 = vsel %vm100, %v98, 0.0
      %103 = vrot.lane.b32.xlu0 %v101, 127
      %v104 = vpop.permute.xlu0 %103
      %v106 = vadd.f32 %v78, %v104
      %107 = vrot.lane.b32.xlu0 %v47, 64
      %v108 = vpop.permute.xlu0 %107
      %v110 = vsel %vm53, %v108, 0.0
      %111 = vadd.xlane.f32.xlu0 %v110
      %v112 = vpop.xlane.xlu0 %111
      %v113 = vrsqrt.pop %v112
      %v114 = vmul.f32 %v112, %v113
      %vm115 = vcmp.eq.f32.partialorder %v112, inf
      %v116 = vsel %vm115, %v112, %v114
      %vm117 = vcmp.eq.f32.partialorder %v112, 0.0
      %v118 = vand.u32 %v112, 2147483648
      %v119 = vsel %vm117, %v118, %v116
      %v120 = vmul.f32 %v64, %v112
      %v121 = vsub.f32 2.0, %v119
      %v122 = vmax.f32 %v121, 0.0
      %v123 = vmul.f32 %v122, %v122
      %v124 = vmul.f32 %v48, %v123
      %v125 = vadd.f32 %v120, %v124
      %v126 = vadd.s32 %v76, 2
      %vm127 = vcmp.lt.s32.totalorder %v126, 8
      %v128 = vsel %vm127, %v125, 0.0
      %130 = vrot.lane.b32.xlu0 %v128, 126
      %v131 = vpop.permute.xlu0 %130
      %v133 = vadd.f32 %v106, %v131
      %134 = vrot.lane.b32.xlu0 %v47, 32
      %v135 = vpop.permute.xlu0 %134
      %v137 = vsel %vm53, %v135, 0.0
      %138 = vadd.xlane.f32.xlu0 %v137
      %v139 = vpop.xlane.xlu0 %138
      %v140 = vrsqrt.pop %v139
      %v141 = vmul.f32 %v139, %v140
      %vm142 = vcmp.eq.f32.partialorder %v139, inf
      %v143 = vsel %vm142, %v139, %v141
      %vm144 = vcmp.eq.f32.partialorder %v139, 0.0
      %v145 = vand.u32 %v139, 2147483648
      %v146 = vsel %vm144, %v145, %v143
      %v147 = vmul.f32 %v64, %v139
      %v148 = vsub.f32 2.0, %v146
      %v149 = vmax.f32 %v148, 0.0
      %v150 = vmul.f32 %v149, %v149
      %v151 = vmul.f32 %v48, %v150
      %v152 = vadd.f32 %v147, %v151
      %v153 = vadd.s32 %v76, 3
      %vm154 = vcmp.lt.s32.totalorder %v153, 8
      %v155 = vsel %vm154, %v152, 0.0
      %157 = vrot.lane.b32.xlu0 %v155, 125
      %v158 = vpop.permute.xlu0 %157
      %v160 = vadd.f32 %v133, %v158
      %vm161 = vcmask 7168
      %v162 = vsel %vm161, %v160, 0.0
      %163 = vadd.xlane.f32.xlu0 %v162
      %v164 = vpop.xlane.xlu0 %163
      %v165 = vrot.slane %v164, 4
      %v166 = vadd.f32 %v164, %v165
      %v167 = vrot.slane %v166, 2
      %v168 = vadd.f32 %v166, %v167
      %v169 = vrot.slane %v168, 1
      %v170 = vadd.f32 %v168, %v169
      %s171 = vtos %v170
      %s172 = scalar_lea.smem [#allocation7], 0
      %173 = sst [smem:[%s172]] %s171
    $region25: #{tpu_custom_call.1} parent=1 // pred_fallthru
      _
    %p174 = scmp.ne.s32.totalorder 0, 0
    // Predicated region
    $region26: #{tpu_custom_call.1} parent=1 // pred_check
      %p175 = pneg %p174
    $region27: #{tpu_custom_call.1} parent=1 // pred_check_branch
      %177 = sbr.rel (%p175) target = $region29
    $region28: #{tpu_custom_call.1} parent=1 // pred_region
      %vm178 = vcmask 261120
      %v179 = vsel %vm178, %v47, 0.0
      %180 = vadd.xlane.f32.xlu0 %v179
      %v181 = vpop.xlane.xlu0 %180
      %v182 = vrsqrt.pop %v181
      %v183 = vmul.f32 %v181, %v182
      %vm184 = vcmp.eq.f32.partialorder %v181, inf
      %v185 = vsel %vm184, %v181, %v183
      %vm186 = vcmp.eq.f32.partialorder %v181, 0.0
      %v187 = vand.u32 %v181, 2147483648
      %v188 = vsel %vm186, %v187, %v185
      %v189 = vsub.f32 1.0, %v48
      %v190 = vmul.f32 %v189, %v181
      %v191 = vsub.f32 2.0, %v188
      %v192 = vmax.f32 %v191, 0.0
      %v193 = vmul.f32 %v192, %v192
      %v194 = vmul.f32 %v48, %v193
      %v195 = vadd.f32 %v190, %v194
      %197 = vrot.lane.b32.xlu0 %v47, 96
      %v198 = vpop.permute.xlu0 %197
      %v200 = vsel %vm178, %v198, 0.0
      %201 = vadd.xlane.f32.xlu0 %v200
      %v202 = vpop.xlane.xlu0 %201
      %v203 = vrsqrt.pop %v202
      %v204 = vmul.f32 %v202, %v203
      %vm205 = vcmp.eq.f32.partialorder %v202, inf
      %v206 = vsel %vm205, %v202, %v204
      %vm207 = vcmp.eq.f32.partialorder %v202, 0.0
      %v208 = vand.u32 %v202, 2147483648
      %v209 = vsel %vm207, %v208, %v206
      %v210 = vmul.f32 %v189, %v202
      %v211 = vsub.f32 2.0, %v209
      %v212 = vmax.f32 %v211, 0.0
      %v213 = vmul.f32 %v212, %v212
      %v214 = vmul.f32 %v48, %v213
      %v215 = vadd.f32 %v210, %v214
      %217 = vrot.lane.b32.xlu0 %v215, 127
      %v218 = vpop.permute.xlu0 %217
      %v220 = vadd.f32 %v195, %v218
      %221 = vrot.lane.b32.xlu0 %v47, 64
      %v222 = vpop.permute.xlu0 %221
      %v224 = vsel %vm178, %v222, 0.0
      %225 = vadd.xlane.f32.xlu0 %v224
      %v226 = vpop.xlane.xlu0 %225
      %v227 = vrsqrt.pop %v226
      %v228 = vmul.f32 %v226, %v227
      %vm229 = vcmp.eq.f32.partialorder %v226, inf
      %v230 = vsel %vm229, %v226, %v228
      %vm231 = vcmp.eq.f32.partialorder %v226, 0.0
      %v232 = vand.u32 %v226, 2147483648
      %v233 = vsel %vm231, %v232, %v230
      %v234 = vmul.f32 %v189, %v226
      %v235 = vsub.f32 2.0, %v233
      %v236 = vmax.f32 %v235, 0.0
      %v237 = vmul.f32 %v236, %v236
      %v238 = vmul.f32 %v48, %v237
      %v239 = vadd.f32 %v234, %v238
      %241 = vrot.lane.b32.xlu0 %v239, 126
      %v242 = vpop.permute.xlu0 %241
      %v244 = vadd.f32 %v220, %v242
      %245 = vrot.lane.b32.xlu0 %v47, 32
      %v246 = vpop.permute.xlu0 %245
      %v248 = vsel %vm178, %v246, 0.0
      %249 = vadd.xlane.f32.xlu0 %v248
      %v250 = vpop.xlane.xlu0 %249
      %v251 = vrsqrt.pop %v250
      %v252 = vmul.f32 %v250, %v251
      %vm253 = vcmp.eq.f32.partialorder %v250, inf
      %v254 = vsel %vm253, %v250, %v252
      %vm255 = vcmp.eq.f32.partialorder %v250, 0.0
      %v256 = vand.u32 %v250, 2147483648
      %v257 = vsel %vm255, %v256, %v254
      %v258 = vmul.f32 %v189, %v250
      %v259 = vsub.f32 2.0, %v257
      %v260 = vmax.f32 %v259, 0.0
      %v261 = vmul.f32 %v260, %v260
      %v262 = vmul.f32 %v48, %v261
      %v263 = vadd.f32 %v258, %v262
      %265 = vrot.lane.b32.xlu0 %v263, 125
      %v266 = vpop.permute.xlu0 %265
      %v268 = vadd.f32 %v244, %v266
      %vm269 = vcmask 7168
      %v270 = vsel %vm269, %v268, 0.0
      %271 = vadd.xlane.f32.xlu0 %v270
      %v272 = vpop.xlane.xlu0 %271
      %v273 = vrot.slane %v272, 4
      %v274 = vadd.f32 %v272, %v273
      %v275 = vrot.slane %v274, 2
      %v276 = vadd.f32 %v274, %v275
      %v277 = vrot.slane %v276, 1
      %v278 = vadd.f32 %v276, %v277
      %s279 = vtos %v278
      %s280 = scalar_lea.smem [#allocation7], 0
      %281 = sst [smem:[%s280]] %s279
    $region29: #{tpu_custom_call.1} parent=1 // pred_fallthru
      _
    // Predicated region
    $region30: #{tpu_custom_call.1} parent=1 // pred_check
      _
    $region31: #{tpu_custom_call.1} parent=1 // pred_check_branch
      %283 = sbr.rel (0) target = $region33
    $region32: #{tpu_custom_call.1} parent=1 // pred_region
      %s285 = ssub.s32 16, 16
      %286 = vsyncadd [#allocation4], %s285
      %289 = dma.smem_to_hbm [#allocation7], 16, %s3, [#allocation4]
    $region33: #{tpu_custom_call.1} parent=1 // pred_fallthru
      _
    // Predicated region
    $region34: #{tpu_custom_call.1} parent=1 // pred_check
      _
    $region35: #{tpu_custom_call.1} parent=1 // pred_check_branch
      %291 = sbr.rel (0) target = $region37
    $region36: #{tpu_custom_call.1} parent=1 // pred_region
      %292 = dma.done [#allocation4], 16
    $region37: #{tpu_custom_call.1} parent=1 // pred_fallthru
      _
    %293 = sfence
    %294 = vsyncpa [#allocation3], 1
    %295 = vsyncpa [#allocation6], 1
    %296 = vsyncpa [#allocation4], 1

</llo_original>
